<compile_context>
chip_gen: v7x
topology: tpu7x:2x2x1
jax: 0.10.0
libtpu: 0.0.40
codegen_flags: <defaults>
</compile_context>

<pallas_src>
import functools

import jax
import jax.numpy as jnp
from jax.experimental import pallas as pl
from jax.experimental.pallas import tpu as pltpu


_MIB = 1024 * 1024
# Per-step working-set target and scoped-VMEM cap.  v7x has only 64 MiB of
# physical VMEM per TensorCore, so never request more than ~48 MiB.
_VMEM_TARGET = 40 * _MIB
_VMEM_CAP = 48 * _MIB


def _round_up(v, m):
    return (v + m - 1) // m * m


def _residual_linear_resident_kernel(x_ref, w_ref, b_ref, o_ref, *, matmul_dtype):
    """Fast path: full (D, D) weight + bias stay resident in VMEM.

    x_ref: (tm, D)  single x stream -- matmul LHS and residual.
    w_ref: (D, D)   resident weight.
    b_ref: (1, D)   resident bias.
    o_ref: (tm, D)  output tile.
    """
    x = x_ref[...]
    xm = x if matmul_dtype is None else x.astype(matmul_dtype)
    y = jnp.dot(xm, w_ref[...], preferred_element_type=jnp.float32)
    # Bias + residual applied exactly once, in f32, then cast out.
    y = y + b_ref[...].astype(jnp.float32) + x.astype(jnp.float32)
    o_ref[...] = y.astype(o_ref.dtype)


def _residual_linear_tiled_kernel(x_ref, w_ref, b_ref, o_ref, acc_ref, *,
                                  matmul_dtype):
    """K/N-tiled fallback for large D.  Requires tk == tn so the LHS tile at
    k == j is exactly the residual tile for this output-column block.

    x_ref: (tm, tk)  x tile (matmul LHS; residual when k == j).
    w_ref: (tk, tn)  weight tile.
    b_ref: (1,  tn)  bias tile.
    o_ref: (tm, tn)  output tile.
    acc_ref: (tm, tn) f32 accumulator (persists across the K axis).
    """
    j = pl.program_id(1)
    k = pl.program_id(2)

    # Fold the bias into the accumulator init: one fewer add in the finalize.
    @pl.when(k == 0)
    def _():
        acc_ref[...] = jnp.broadcast_to(
            b_ref[...].astype(jnp.float32), acc_ref.shape)

    x = x_ref[...]

    # tk == tn, so this LHS tile is the residual tile when k == j: add it once.
    @pl.when(k == j)
    def _():
        acc_ref[...] += x.astype(jnp.float32)

    xm = x if matmul_dtype is None else x.astype(matmul_dtype)
    acc_ref[...] += jnp.dot(xm, w_ref[...], preferred_element_type=jnp.float32)

    @pl.when(k == pl.num_programs(2) - 1)
    def _():
        o_ref[...] = acc_ref[...].astype(o_ref.dtype)


def residual_linear(x, w, b, *, tm=512, kn_tile=256, matmul_dtype=None,
                    resident_w_bytes=4 * _MIB):
    """Computes Residual(Linear)(x) = (x @ w + b) + x with one fused kernel.

    x: (B, N, D), w: (D, D), b: (D,)
    matmul_dtype: e.g. jnp.bfloat16 to run the MXU in bf16 (f32 accumulation,
      residual add stays in f32).  Opt-in precision reduction.
    """
    B, N, D = x.shape
    assert w.shape == (D, D) and b.shape == (D,)
    M = B * N

    x2 = x.reshape(M, D)
    b2 = b.reshape(1, D)
    if matmul_dtype is not None:
        # Cast the weight once outside the kernel (halves its HBM traffic and
        # avoids a per-K-step cast); x is cast per-tile inside the kernel so
        # the residual add keeps full precision with a single x stream.
        w = w.astype(matmul_dtype)

    x_item = x.dtype.itemsize
    w_item = w.dtype.itemsize
    b_item = b.dtype.itemsize

    # Row tile: as big as requested (amortizes ~0.35 us/step grid overhead and
    # weight re-reads), but keep >= 2 row blocks when there is enough work so
    # both of v7x's TensorCores are used.
    tm = max(8, min(_round_up(tm, 8), _round_up(M, 8)))
    if M > 8 and pl.cdiv(M, tm) < 2:
        tm = max(8, _round_up(pl.cdiv(M, 2), 8))

    # Resident-weight path whenever W fits a modest VMEM budget (or D is not
    # lane-aligned, in which case blocks must span the full D anyway).
    use_resident = (D % 128 != 0) or (D * D * w_item <= resident_w_bytes)

    if use_resident:
        def footprint(t):
            return (2 * t * D * x_item          # x (double-buffered)
                    + 2 * D * D * w_item        # resident W (2 buffers)
                    + 2 * D * b_item            # resident bias
                    + 2 * t * D * x_item)       # output
        while tm > 8 and footprint(tm) > _VMEM_TARGET:
            tm = max(8, _round_up(tm // 2, 8))
        tn = tk = D
    else:
        # Tiled fallback: tk == tn is required by the k == j residual fold.
        # 256-wide tiles fill the 256x256 MXU on v6e/v7x.
        tile = kn_tile if (kn_tile >= 128 and D % kn_tile == 0) else 128
        tn = tk = tile

        def footprint(t):
            return (2 * t * tk * x_item         # x tile
                    + 2 * tk * tn * w_item      # weight tile
                    + 2 * tn * b_item           # bias tile
                    + 2 * t * tn * x_item       # output tile
                    + t * tn * 4)               # f32 accumulator
        while tm > 8 and footprint(tm) > _VMEM_TARGET:
            tm = max(8, _round_up(tm // 2, 8))

    # Ragged rows: pad small inputs up to the row tile (the copy is cheap and
    # keeps every block fully in-bounds); for large inputs skip the full-x pad
    # copy and let Pallas mask the last partial row block.
    Mp = M
    if M % tm != 0 and M * D * x_item <= 16 * _MIB:
        Mp = _round_up(M, tm)
        x2 = jnp.pad(x2, ((0, Mp - M), (0, 0)))

    kernel_dtype_kw = dict(matmul_dtype=matmul_dtype)

    if use_resident:
        grid = (pl.cdiv(Mp, tm),)
        kernel = functools.partial(_residual_linear_resident_kernel,
                                   **kernel_dtype_kw)
        grid_spec = pltpu.PrefetchScalarGridSpec(
            num_scalar_prefetch=0,
            grid=grid,
            in_specs=[
                pl.BlockSpec((tm, D), lambda i: (i, 0)),   # x (LHS + residual)
                pl.BlockSpec((D, D), lambda i: (0, 0)),    # W, resident
                pl.BlockSpec((1, D), lambda i: (0, 0)),    # bias, resident
            ],
            out_specs=pl.BlockSpec((tm, D), lambda i: (i, 0)),
        )
        semantics = ("parallel",)
    else:
        grid = (pl.cdiv(Mp, tm), D // tn, D // tk)
        kernel = functools.partial(_residual_linear_tiled_kernel,
                                   **kernel_dtype_kw)
        grid_spec = pltpu.PrefetchScalarGridSpec(
            num_scalar_prefetch=0,
            grid=grid,
            in_specs=[
                pl.BlockSpec((tm, tk), lambda i, j, k: (i, k)),  # x tile
                pl.BlockSpec((tk, tn), lambda i, j, k: (k, j)),  # weight tile
                pl.BlockSpec((1, tn), lambda i, j, k: (0, j)),   # bias tile
            ],
            out_specs=pl.BlockSpec((tm, tn), lambda i, j, k: (i, j)),
            scratch_shapes=[pltpu.VMEM((tm, tn), jnp.float32)],
        )
        semantics = ("parallel", "parallel", "arbitrary")

    vmem_limit = int(min(_VMEM_CAP, max(32 * _MIB, footprint(tm) + 4 * _MIB)))

    out = pl.pallas_call(
        kernel,
        out_shape=jax.ShapeDtypeStruct((Mp, D), x.dtype),
        grid_spec=grid_spec,
        compiler_params=pltpu.CompilerParams(
            dimension_semantics=semantics,
            vmem_limit_bytes=vmem_limit,
        ),
    )(x2, w, b2)

    if Mp != M:
        out = out[:M]
    return out.reshape(B, N, D)


if __name__ == "__main__":
    key = jax.random.PRNGKey(0)
    kx, kw, kb = jax.random.split(key, 3)

    # Small but lane-dense shapes: seq=64, hidden=256 (multiple of 128).
    B, N, D = 2, 64, 256
    x = jax.random.normal(kx, (B, N, D), dtype=jnp.float32)
    # Deterministic synthetic parameters for fn = Linear(D, D).
    w = jax.random.normal(kw, (D, D), dtype=jnp.float32) * (1.0 / jnp.sqrt(D))
    b = jax.random.normal(kb, (D,), dtype=jnp.float32) * 0.02

    ref = jnp.einsum("bnd,de->bne", x, w) + b + x

    # 1) Resident-weight fast path (default config).
    out = jax.block_until_ready(residual_linear(x, w, b))
    assert out.shape == (B, N, D)
    assert jnp.allclose(out, ref, atol=1e-4, rtol=1e-4)

    # 2) Ragged-row path (M not a multiple of the row tile).
    x_odd = x[:, :37, :]
    out_odd = jax.block_until_ready(residual_linear(x_odd, w, b))
    ref_odd = jnp.einsum("bnd,de->bne", x_odd, w) + b + x_odd
    assert jnp.allclose(out_odd, ref_odd, atol=1e-4, rtol=1e-4)

    # 3) K/N-tiled fallback path (forced), with the k == j residual fold.
    out_tiled = jax.block_until_ready(
        residual_linear(x, w, b, resident_w_bytes=0, kn_tile=128))
    assert jnp.allclose(out_tiled, ref, atol=1e-4, rtol=1e-4)

    # 4) bf16 MXU path (f32 accumulation) -- loose tolerance, precision opt-in.
    out_bf16 = jax.block_until_ready(
        residual_linear(x, w, b, matmul_dtype=jnp.bfloat16))
    assert jnp.allclose(out_bf16, ref, atol=1e-1, rtol=1e-1)

    # TODO(synk): Residual.fn is arbitrary in PyTorch; only the Linear(D, D)
    # instantiation is fused here.
    print("KERNEL_OK")
</pallas_src>

<mosaic_0001>
module attributes {stable_mosaic.version = 11 : i64} {
  func.func @_residual_linear_resident_kernel(%arg0: i32, %arg1: memref<64x256xf32, #tpu.memory_space<vmem>>, %arg2: memref<256x256xf32, #tpu.memory_space<vmem>>, %arg3: memref<1x256xf32, #tpu.memory_space<vmem>>, %arg4: memref<64x256xf32, #tpu.memory_space<vmem>>) attributes {dimension_semantics = [#tpu.dimension_semantics<parallel>], iteration_bounds = array<i64: 2>, scalar_prefetch = 0 : i64, scratch_operands = 0 : i64, tpu.core_type = #tpu.core_type<tc>, window_params = [{transform_indices = @transform_0, window_bounds = array<i64: 64, 256>}, {pipeline_mode = #tpu.pipeline_mode<synchronous>, transform_indices = @transform_1, window_bounds = array<i64: 256, 256>}, {pipeline_mode = #tpu.pipeline_mode<synchronous>, transform_indices = @transform_2, window_bounds = array<i64: 1, 256>}, {transform_indices = @transform_3, window_bounds = array<i64: 64, 256>}]} {
    %c0 = arith.constant 0 : index
    %c0_0 = arith.constant 0 : index
    %0 = vector.load %arg1[%c0, %c0_0] : memref<64x256xf32, #tpu.memory_space<vmem>>, vector<64x256xf32>
    %c0_1 = arith.constant 0 : index
    %c0_2 = arith.constant 0 : index
    %1 = vector.load %arg2[%c0_1, %c0_2] : memref<256x256xf32, #tpu.memory_space<vmem>>, vector<256x256xf32>
    %cst = arith.constant dense<0.000000e+00> : vector<64x256xf32>
    %2 = tpu.matmul %0, %1, %cst {dimension_numbers = #tpu.dot_dimension_numbers<[1], [0], [0], [1], [0, 0, 1, 1], [], []>} : vector<64x256xf32>, vector<256x256xf32>, vector<64x256xf32> -> vector<64x256xf32>
    %c0_3 = arith.constant 0 : index
    %c0_4 = arith.constant 0 : index
    %3 = vector.load %arg3[%c0_3, %c0_4] : memref<1x256xf32, #tpu.memory_space<vmem>>, vector<1x256xf32>
    %4 = vector.broadcast %3 : vector<1x256xf32> to vector<64x256xf32>
    %5 = arith.addf %2, %4 : vector<64x256xf32>
    %6 = arith.addf %5, %0 : vector<64x256xf32>
    %c0_5 = arith.constant 0 : index
    %c0_6 = arith.constant 0 : index
    %7 = vector.load %arg4[%c0_5, %c0_6] : memref<64x256xf32, #tpu.memory_space<vmem>>, vector<64x256xf32>
    tpu.vector_store %arg4[%c0_5, %c0_6], %6 {strides = array<i32>} : memref<64x256xf32, #tpu.memory_space<vmem>>, vector<64x256xf32>,
    return
  }
  func.func @transform_0(%arg0: i32) -> (i32, i32) {
    %c0_i32 = arith.constant 0 : i32
    %c0_i32_0 = arith.constant 0 : i32
    return %arg0, %c0_i32 : i32, i32
  }
  func.func @transform_1(%arg0: i32) -> (i32, i32) {
    %c0_i32 = arith.constant 0 : i32
    %c0_i32_0 = arith.constant 0 : i32
    %c0_i32_1 = arith.constant 0 : i32
    return %c0_i32, %c0_i32_0 : i32, i32
  }
  func.func @transform_2(%arg0: i32) -> (i32, i32) {
    %c0_i32 = arith.constant 0 : i32
    %c0_i32_0 = arith.constant 0 : i32
    %c0_i32_1 = arith.constant 0 : i32
    return %c0_i32, %c0_i32_0 : i32, i32
  }
  func.func @transform_3(%arg0: i32) -> (i32, i32) {
    %c0_i32 = arith.constant 0 : i32
    %c0_i32_0 = arith.constant 0 : i32
    return %arg0, %c0_i32 : i32, i32
  }
}

</mosaic_0001>

<llo_original>
// kernel: tpu_custom_call.1
$region0: #{tpu_custom_call.1}
  #allocation0 [shape = 'u32[]', space=smem, size = 0x4, offset = 0x4, fixed_abs, tag = 'smem constant byte address 0x4 - core index']
  #allocation1 [shape = 'u32[144,128]{1,0:T(1,128)}', space=vmem, size = 0x12000, scoped, tag = 'internal scratch']
  %s0 = inlined_call_operand.hbm [shape: f32[128,256], index: 0, kind: input, shape index: {}]
  %s1 = inlined_call_operand.hbm [shape: f32[256,256], index: 1, kind: input, shape index: {}]
  %s2 = inlined_call_operand.vmem [shape: f32[1,256], index: 2, kind: input, shape index: {}]
  %s3 = inlined_call_operand.hbm [shape: f32[128,256], index: 3, kind: output, shape index: {}]
  %s4 = sld [smem:[#allocation0]]
  $region53: #{tpu_custom_call.1} parent=0
    _
  %s6 = ssub.s32 1, %s4
  %s7 = scalar_select 0, %s6, %s4
  $region1: #{tpu_custom_call.1} parent=0
    #allocation2 [shape = 'u8[131072]{0}', space=vmem, size = 0x20000, scoped, tag = 'input window, operand 0']
    #allocation3 [shape = 's32[2]{0}', space=sflag, size = 0x8, scoped, tag = 'scoped memory for tpu_custom_call.1']
    #allocation4 [shape = 's32[2]{0}', space=sflag, size = 0x8, scoped, tag = 'scoped memory for tpu_custom_call.1']
    #allocation5 [shape = 'u8[262144]{0}', space=vmem, size = 0x40000, scoped, tag = 'input window, operand 1, single buffered']
    #allocation6 [shape = 's32[1]{0}', space=sflag, size = 0x4, scoped, tag = 'scoped memory for tpu_custom_call.1']
    #allocation7 [shape = 'u8[131072]{0}', space=vmem, size = 0x20000, scoped, tag = 'output window, operand 0']
    %8 = vsyncpa [#allocation3], 0
    %s9 = scalar_lea.sflag [#allocation3], 1
    %10 = vsyncpa %s9, 0
    %11 = vsyncpa [#allocation6], 0
    %12 = vsyncpa [#allocation4], 0
    %s13 = scalar_lea.sflag [#allocation4], 1
    %14 = vsyncpa %s13, 0
    loop: start=0, step=1, limit=4
    $region2: #{tpu_custom_call.1} parent=1 // loop_pre_header
      _
    $region3: #{tpu_custom_call.1} parent=1 // loop_header
      %s16 = sphi 0, %s20
      %p17 = scmp.ge.s32.totalorder %s16, 4
      %s26 = sphi 0, %s28
      %s29 = sphi 0, %s26
      %s30 = sphi 0, %s29
      %s46 = sphi 0, %s30
      %s50 = sphi 0, %s50
      %s52 = sphi 0, %s50
      %s53 = sphi 0, %s52
      %s67 = sphi 0, %s53
      %s71 = sphi 0, %s71
      %s73 = sphi 0, %s71
      %s74 = sphi 0, %s73
      %s88 = sphi 0, %s74
      %s94 = sphi 0, %s96
      %s97 = sphi 0, %s94
      %s98 = sphi 0, %s97
      %s114 = sphi 0, %s98
    $region4: #{tpu_custom_call.1} parent=1 // loop_header_branch
      %19 = sbr.rel (%p17) target = $region8
    $region5: #{tpu_custom_call.1} parent=1 // loop_body
      %s21 = ssub.s32 %s16, 1
      %s22 = ssub.s32 %s16, 2
      %s23 = sadd.s32 %s16, 1
      %s24 = ssub.s32 %s16, %s23
      %p25 = scmp.eq.s32.totalorder %s24, 0
      %s27 = sadd.s32 %s26, 1
      %s28 = scalar_select %p25, %s26, %s27
      %p31 = pneg %p25
      %p32 = scmp.eq.s32.totalorder %s16, 1
      %p33 = por %p31, %p32
      %p34 = scmp.ne.s32.totalorder %s26, %s29
      %p35 = scmp.eq.s32.totalorder %s16, 0
      %p36 = por %p34, %p35
      %p37 = scmp.ne.s32.totalorder %s26, %s29
      %p38 = scmp.eq.s32.totalorder %s21, 1
      %p39 = por %p37, %p38
      %p40 = scmp.ne.s32.totalorder %s29, %s30
      %p41 = scmp.eq.s32.totalorder %s21, 0
      %p42 = por %p40, %p41
      %p43 = scmp.ne.s32.totalorder %s29, %s30
      %p44 = scmp.eq.s32.totalorder %s22, 1
      %p45 = por %p43, %p44
      %p47 = scmp.ne.s32.totalorder %s30, %s46
      %p48 = scmp.eq.s32.totalorder %s22, 0
      %p49 = por %p47, %p48
      %s51 = sadd.s32 %s50, 1
      %p54 = scmp.eq.s32.totalorder %s16, 1
      %p55 = scmp.ne.s32.totalorder %s50, %s52
      %p56 = scmp.eq.s32.totalorder %s16, 0
      %p57 = por %p55, %p56
      %p58 = scmp.ne.s32.totalorder %s50, %s52
      %p59 = scmp.eq.s32.totalorder %s21, 1
      %p60 = por %p58, %p59
      %p61 = scmp.ne.s32.totalorder %s52, %s53
      %p62 = scmp.eq.s32.totalorder %s21, 0
      %p63 = por %p61, %p62
      %p64 = scmp.ne.s32.totalorder %s52, %s53
      %p65 = scmp.eq.s32.totalorder %s22, 1
      %p66 = por %p64, %p65
      %p68 = scmp.ne.s32.totalorder %s53, %s67
      %p69 = scmp.eq.s32.totalorder %s22, 0
      %p70 = por %p68, %p69
      %s72 = sadd.s32 %s71, 1
      %p75 = scmp.eq.s32.totalorder %s16, 1
      %p76 = scmp.ne.s32.totalorder %s71, %s73
      %p77 = scmp.eq.s32.totalorder %s16, 0
      %p78 = por %p76, %p77
      %p79 = scmp.ne.s32.totalorder %s71, %s73
      %p80 = scmp.eq.s32.totalorder %s21, 1
      %p81 = por %p79, %p80
      %p82 = scmp.ne.s32.totalorder %s73, %s74
      %p83 = scmp.eq.s32.totalorder %s21, 0
      %p84 = por %p82, %p83
      %p85 = scmp.ne.s32.totalorder %s73, %s74
      %p86 = scmp.eq.s32.totalorder %s22, 1
      %p87 = por %p85, %p86
      %p89 = scmp.ne.s32.totalorder %s74, %s88
      %p90 = scmp.eq.s32.totalorder %s22, 0
      %p91 = por %p89, %p90
      %s92 = ssub.s32 %s16, %s23
      %p93 = scmp.eq.s32.totalorder %s92, 0
      %s95 = sadd.s32 %s94, 1
      %s96 = scalar_select %p93, %s94, %s95
      %p99 = pneg %p93
      %p100 = scmp.eq.s32.totalorder %s16, 1
      %p101 = por %p99, %p100
      %p102 = scmp.ne.s32.totalorder %s94, %s97
      %p103 = scmp.eq.s32.totalorder %s16, 0
      %p104 = por %p102, %p103
      %p105 = scmp.ne.s32.totalorder %s94, %s97
      %p106 = scmp.eq.s32.totalorder %s21, 1
      %p107 = por %p105, %p106
      %p108 = scmp.ne.s32.totalorder %s97, %s98
      %p109 = scmp.eq.s32.totalorder %s21, 0
      %p110 = por %p108, %p109
      %p111 = scmp.ne.s32.totalorder %s97, %s98
      %p112 = scmp.eq.s32.totalorder %s22, 1
      %p113 = por %p111, %p112
      %p115 = scmp.ne.s32.totalorder %s98, %s114
      %p116 = scmp.eq.s32.totalorder %s22, 0
      %p117 = por %p115, %p116
      %p118 = scmp.le.s32.totalorder 1, %s16
      %p119 = scmp.lt.s32.totalorder %s16, 3
      %p120 = pnand %p118, %p119
      %p121 = pneg %p120
      // Predicated region
      $region9: #{tpu_custom_call.1} parent=5 // pred_check
        _
      $region10: #{tpu_custom_call.1} parent=5 // pred_check_branch
        %123 = sbr.rel (%p120) target = $region12
      $region11: #{tpu_custom_call.1} parent=5 // pred_region
        %s124 = ssub.s32 %s16, 1
        // Predicated region
        $region13: #{tpu_custom_call.1} parent=11 // pred_check
          %p125 = pneg %p63
        $region14: #{tpu_custom_call.1} parent=11 // pred_check_branch
          %127 = sbr.rel (%p125) target = $region16
        $region15: #{tpu_custom_call.1} parent=11 // pred_region
          %s129 = ssub.s32 8192, 8192
          %130 = vsyncadd [#allocation6], %s129
          %s131 = sshll.u32 [#allocation5], 4
          %s132 = int_to_ptr.vmem [resolvable:$true] %s131
          %137 = dma.hbm_to_vmem [thread:$0]  %s1, 8192, %s132, [#allocation6], 256, 256, 16
        $region16: #{tpu_custom_call.1} parent=11 // pred_fallthru
          _
        // Predicated region
        $region17: #{tpu_custom_call.1} parent=11 // pred_check
          %p138 = pneg %p84
        $region18: #{tpu_custom_call.1} parent=11 // pred_check_branch
          %140 = sbr.rel (%p138) target = $region20
        $region19: #{tpu_custom_call.1} parent=11 // pred_region
          _
        $region20: #{tpu_custom_call.1} parent=11 // pred_fallthru
          _
      $region12: #{tpu_custom_call.1} parent=5 // pred_fallthru
        _
      %p141 = scmp.lt.s32.totalorder %s16, 2
      // Predicated region
      $region21: #{tpu_custom_call.1} parent=5 // pred_check
        %p142 = pneg %p141
      $region22: #{tpu_custom_call.1} parent=5 // pred_check_branch
        %144 = sbr.rel (%p142) target = $region24
      $region23: #{tpu_custom_call.1} parent=5 // pred_region
        // Predicated region
        $region25: #{tpu_custom_call.1} parent=23 // pred_check
          %p145 = pneg %p36
        $region26: #{tpu_custom_call.1} parent=23 // pred_check_branch
          %147 = sbr.rel (%p145) target = $region28
        $region27: #{tpu_custom_call.1} parent=23 // pred_region
          %s148 = sand.u32 %s26, 1
          %s149 = scalar_lea.sflag [#allocation3], %s148
          %s150 = sand.u32 %s26, 1
          %s151 = smul.addr %s150, 128
          %s152 = scalar_lea.vmem [#allocation2], %s151
          %s153 = smul.u32 8, %s16
          %s155 = ssub.s32 2048, 2048
          %156 = vsyncadd %s149, %s155
          %s157 = smul.addr %s153, 2
          %s158 = smul.addr %s157, 128
          %s159 = scalar_lea.hbm %s0, %s158
          %s160 = sshll.u32 %s152, 4
          %s161 = int_to_ptr.vmem [resolvable:$true] %s160
          %166 = dma.hbm_to_vmem [thread:$0]  %s159, 2048, %s161, %s149, 256, 256, 16
        $region28: #{tpu_custom_call.1} parent=23 // pred_fallthru
          _
      $region24: #{tpu_custom_call.1} parent=5 // pred_fallthru
        _
      %p167 = scmp.le.s32.totalorder 1, %s16
      %p168 = scmp.lt.s32.totalorder %s16, 3
      %p169 = pnand %p167, %p168
      %p170 = pneg %p169
      // Predicated region
      $region29: #{tpu_custom_call.1} parent=5 // pred_check
        _
      $region30: #{tpu_custom_call.1} parent=5 // pred_check_branch
        %172 = sbr.rel (%p169) target = $region32
      $region31: #{tpu_custom_call.1} parent=5 // pred_region
        %s173 = ssub.s32 %s16, 1
        %s174 = sand.u32 %s29, 1
        %s175 = scalar_lea.sflag [#allocation3], %s174
        %s176 = sand.u32 %s29, 1
        %s177 = smul.addr %s176, 128
        %s178 = scalar_lea.vmem [#allocation2], %s177
        // Predicated region
        $region33: #{tpu_custom_call.1} parent=31 // pred_check
          %p179 = pneg %p42
        $region34: #{tpu_custom_call.1} parent=31 // pred_check_branch
          %181 = sbr.rel (%p179) target = $region36
        $region35: #{tpu_custom_call.1} parent=31 // pred_region
          %182 = dma.done %s175, 2048
        $region36: #{tpu_custom_call.1} parent=31 // pred_fallthru
          _
        // Predicated region
        $region37: #{tpu_custom_call.1} parent=31 // pred_check
          %p183 = pneg %p63
        $region38: #{tpu_custom_call.1} parent=31 // pred_check_branch
          %185 = sbr.rel (%p183) target = $region40
        $region39: #{tpu_custom_call.1} parent=31 // pred_region
          %186 = dma.done [#allocation6], 8192
        $region40: #{tpu_custom_call.1} parent=31 // pred_fallthru
          _
        %s187 = sand.u32 %s29, 1
        %s188 = scalar_lea.sflag [#allocation3], %s187
        %s189 = sand.u32 %s29, 1
        %s190 = smul.addr %s189, 128
        %s191 = scalar_lea.vmem [#allocation2], %s190
        %p192 = pneg %p42
        %p193 = pneg %p39
        %p194 = pneg %p63
        %p195 = pneg %p60
        %p196 = pneg %p84
        %p197 = pneg %p81
        %p198 = pneg %p110
        %p199 = pneg %p107
        %s200 = sand.u32 %s97, 1
        %s201 = scalar_lea.sflag [#allocation4], %s200
        %s202 = sand.u32 %s97, 1
        %s203 = smul.addr %s202, 128
        %s204 = scalar_lea.vmem [#allocation7], %s203
        %s205 = smul.u32 8, %s21
        %s206 = smul.u32 8, %s21
        %v207 = vld [vmem:[%s178] sm:$0xff]
        %v208 = vld [vmem:[%s178 + $0x8] sm:$0xff]
        %v209 = vld [vmem:[%s178 + $0x10] sm:$0xff]
        %v210 = vld [vmem:[%s178 + $0x18] sm:$0xff]
        %v211 = vld [vmem:[%s178 + $0x20] sm:$0xff]
        %v212 = vld [vmem:[%s178 + $0x28] sm:$0xff]
        %v213 = vld [vmem:[%s178 + $0x30] sm:$0xff]
        %v214 = vld [vmem:[%s178 + $0x38] sm:$0xff]
        %v215 = vld [vmem:[%s178 + $0x40] sm:$0xff]
        %v216 = vld [vmem:[%s178 + $0x48] sm:$0xff]
        %v217 = vld [vmem:[%s178 + $0x50] sm:$0xff]
        %v218 = vld [vmem:[%s178 + $0x58] sm:$0xff]
        %v219 = vld [vmem:[%s178 + $0x60] sm:$0xff]
        %v220 = vld [vmem:[%s178 + $0x68] sm:$0xff]
        %v221 = vld [vmem:[%s178 + $0x70] sm:$0xff]
        %v222 = vld [vmem:[%s178 + $0x78] sm:$0xff]
        %v223 = vld [vmem:[#allocation5] sm:$0xff]
        %v224 = vld [vmem:[#allocation5 + $0x8] sm:$0xff]
        %v225 = vld [vmem:[#allocation5 + $0x10] sm:$0xff]
        %v226 = vld [vmem:[#allocation5 + $0x18] sm:$0xff]
        %v227 = vld [vmem:[#allocation5 + $0x20] sm:$0xff]
        %v228 = vld [vmem:[#allocation5 + $0x28] sm:$0xff]
        %v229 = vld [vmem:[#allocation5 + $0x30] sm:$0xff]
        %v230 = vld [vmem:[#allocation5 + $0x38] sm:$0xff]
        %v231 = vld [vmem:[#allocation5 + $0x40] sm:$0xff]
        %v232 = vld [vmem:[#allocation5 + $0x48] sm:$0xff]
        %v233 = vld [vmem:[#allocation5 + $0x50] sm:$0xff]
        %v234 = vld [vmem:[#allocation5 + $0x58] sm:$0xff]
        %v235 = vld [vmem:[#allocation5 + $0x60] sm:$0xff]
        %v236 = vld [vmem:[#allocation5 + $0x68] sm:$0xff]
        %v237 = vld [vmem:[#allocation5 + $0x70] sm:$0xff]
        %v238 = vld [vmem:[#allocation5 + $0x78] sm:$0xff]
        %v239 = vld [vmem:[#allocation5 + $0x80] sm:$0xff]
        %v240 = vld [vmem:[#allocation5 + $0x88] sm:$0xff]
        %v241 = vld [vmem:[#allocation5 + $0x90] sm:$0xff]
        %v242 = vld [vmem:[#allocation5 + $0x98] sm:$0xff]
        %v243 = vld [vmem:[#allocation5 + $0xa0] sm:$0xff]
        %v244 = vld [vmem:[#allocation5 + $0xa8] sm:$0xff]
        %v245 = vld [vmem:[#allocation5 + $0xb0] sm:$0xff]
        %v246 = vld [vmem:[#allocation5 + $0xb8] sm:$0xff]
        %v247 = vld [vmem:[#allocation5 + $0xc0] sm:$0xff]
        %v248 = vld [vmem:[#allocation5 + $0xc8] sm:$0xff]
        %v249 = vld [vmem:[#allocation5 + $0xd0] sm:$0xff]
        %v250 = vld [vmem:[#allocation5 + $0xd8] sm:$0xff]
        %v251 = vld [vmem:[#allocation5 + $0xe0] sm:$0xff]
        %v252 = vld [vmem:[#allocation5 + $0xe8] sm:$0xff]
        %v253 = vld [vmem:[#allocation5 + $0xf0] sm:$0xff]
        %v254 = vld [vmem:[#allocation5 + $0xf8] sm:$0xff]
        %v255 = vld [vmem:[#allocation5 + $0x100] sm:$0xff]
        %v256 = vld [vmem:[#allocation5 + $0x108] sm:$0xff]
        %v257 = vld [vmem:[#allocation5 + $0x110] sm:$0xff]
        %v258 = vld [vmem:[#allocation5 + $0x118] sm:$0xff]
        %v259 = vld [vmem:[#allocation5 + $0x120] sm:$0xff]
        %v260 = vld [vmem:[#allocation5 + $0x128] sm:$0xff]
        %v261 = vld [vmem:[#allocation5 + $0x130] sm:$0xff]
        %v262 = vld [vmem:[#allocation5 + $0x138] sm:$0xff]
        %v263 = vld [vmem:[#allocation5 + $0x140] sm:$0xff]
        %v264 = vld [vmem:[#allocation5 + $0x148] sm:$0xff]
        %v265 = vld [vmem:[#allocation5 + $0x150] sm:$0xff]
        %v266 = vld [vmem:[#allocation5 + $0x158] sm:$0xff]
        %v267 = vld [vmem:[#allocation5 + $0x160] sm:$0xff]
        %v268 = vld [vmem:[#allocation5 + $0x168] sm:$0xff]
        %v269 = vld [vmem:[#allocation5 + $0x170] sm:$0xff]
        %v270 = vld [vmem:[#allocation5 + $0x178] sm:$0xff]
        %v271 = vld [vmem:[#allocation5 + $0x180] sm:$0xff]
        %v272 = vld [vmem:[#allocation5 + $0x188] sm:$0xff]
        %v273 = vld [vmem:[#allocation5 + $0x190] sm:$0xff]
        %v274 = vld [vmem:[#allocation5 + $0x198] sm:$0xff]
        %v275 = vld [vmem:[#allocation5 + $0x1a0] sm:$0xff]
        %v276 = vld [vmem:[#allocation5 + $0x1a8] sm:$0xff]
        %v277 = vld [vmem:[#allocation5 + $0x1b0] sm:$0xff]
        %v278 = vld [vmem:[#allocation5 + $0x1b8] sm:$0xff]
        %v279 = vld [vmem:[#allocation5 + $0x1c0] sm:$0xff]
        %v280 = vld [vmem:[#allocation5 + $0x1c8] sm:$0xff]
        %v281 = vld [vmem:[#allocation5 + $0x1d0] sm:$0xff]
        %v282 = vld [vmem:[#allocation5 + $0x1d8] sm:$0xff]
        %v283 = vld [vmem:[#allocation5 + $0x1e0] sm:$0xff]
        %v284 = vld [vmem:[#allocation5 + $0x1e8] sm:$0xff]
        %v285 = vld [vmem:[#allocation5 + $0x1f0] sm:$0xff]
        %v286 = vld [vmem:[#allocation5 + $0x1f8] sm:$0xff]
        %v287 = vld [vmem:[%s2] sm:$0x3]
        %v289 = vlaneseq
        %v290 = vshrl.u32 %v289, 7
        %v291 = vsub.s32 0, %v290
        %v292 = vrot.slane %v287, %v291
        %v293 = vlaneseq
        %v294 = vshrl.u32 %v293, 7
        %v295 = vsub.s32 1, %v294
        %v296 = vrot.slane %v287, %v295
        %299 = vmatprep.subr.mxu0 %v224
        %300 = vmatpush1.msra.mxu0 %v223
        %301 = vmatprep.subr.mxu0 %v226
        %302 = vmatpush1.msra.mxu0 %v225
        %303 = vmatprep.subr.mxu0 %v228
        %304 = vmatpush1.msra.mxu0 %v227
        %305 = vmatprep.subr.mxu0 %v230
        %306 = vmatpush1.msra.mxu0 %v229
        %307 = vmatprep.subr.mxu0 %v232
        %308 = vmatpush1.msra.mxu0 %v231
        %309 = vmatprep.subr.mxu0 %v234
        %310 = vmatpush1.msra.mxu0 %v233
        %311 = vmatprep.subr.mxu0 %v236
        %312 = vmatpush1.msra.mxu0 %v235
        %313 = vmatprep.subr.mxu0 %v238
        %314 = vmatpush1.msra.mxu0 %v237
        %315 = vmatprep.subr.mxu0 %v240
        %316 = vmatpush1.msra.mxu0 %v239
        %317 = vmatprep.subr.mxu0 %v242
        %318 = vmatpush1.msra.mxu0 %v241
        %319 = vmatprep.subr.mxu0 %v244
        %320 = vmatpush1.msra.mxu0 %v243
        %321 = vmatprep.subr.mxu0 %v246
        %322 = vmatpush1.msra.mxu0 %v245
        %323 = vmatprep.subr.mxu0 %v248
        %324 = vmatpush1.msra.mxu0 %v247
        %325 = vmatprep.subr.mxu0 %v250
        %326 = vmatpush1.msra.mxu0 %v249
        %327 = vmatprep.subr.mxu0 %v252
        %328 = vmatpush1.msra.mxu0 %v251
        %329 = vmatprep.subr.mxu0 %v254
        %330 = vmatpush1.msra.mxu0 %v253
        %331 = vmatprep.subr.mxu0 %v256
        %332 = vmatpush1.msra.mxu0 %v255
        %333 = vmatprep.subr.mxu0 %v258
        %334 = vmatpush1.msra.mxu0 %v257
        %335 = vmatprep.subr.mxu0 %v260
        %336 = vmatpush1.msra.mxu0 %v259
        %337 = vmatprep.subr.mxu0 %v262
        %338 = vmatpush1.msra.mxu0 %v261
        %339 = vmatprep.subr.mxu0 %v264
        %340 = vmatpush1.msra.mxu0 %v263
        %341 = vmatprep.subr.mxu0 %v266
        %342 = vmatpush1.msra.mxu0 %v265
        %343 = vmatprep.subr.mxu0 %v268
        %344 = vmatpush1.msra.mxu0 %v267
        %345 = vmatprep.subr.mxu0 %v270
        %346 = vmatpush1.msra.mxu0 %v269
        %347 = vmatprep.subr.mxu0 %v272
        %348 = vmatpush1.msra.mxu0 %v271
        %349 = vmatprep.subr.mxu0 %v274
        %350 = vmatpush1.msra.mxu0 %v273
        %351 = vmatprep.subr.mxu0 %v276
        %352 = vmatpush1.msra.mxu0 %v275
        %353 = vmatprep.subr.mxu0 %v278
        %354 = vmatpush1.msra.mxu0 %v277
        %355 = vmatprep.subr.mxu0 %v280
        %356 = vmatpush1.msra.mxu0 %v279
        %357 = vmatprep.subr.mxu0 %v282
        %358 = vmatpush1.msra.mxu0 %v281
        %359 = vmatprep.subr.mxu0 %v284
        %360 = vmatpush1.msra.mxu0 %v283
        %361 = vmatprep.subr.mxu0 %v286
        %362 = vmatpush1.msra.mxu0 %v285
        %363 = vmatprep.mubr.f32.mxu0 %v208
        %364 = vmatmul.mubr.f32.gmra.mrb[0].mxu0 %v207
        %v365 = vpop.f32.mrb[0].mxu0
        %v366 = vadd.f32 %v292, %v365
        %v367 = vpop.f32.mrb[0].mxu0
        %v368 = vadd.f32 %v296, %v367
        %369 = vmatprep.mubr.f32.mxu0 %v210
        %370 = vmatmul.mubr.f32.gmra.mrb[0].mxu0 %v209
        %v371 = vpop.f32.mrb[0].mxu0
        %v372 = vadd.f32 %v292, %v371
        %v373 = vpop.f32.mrb[0].mxu0
        %v374 = vadd.f32 %v296, %v373
        %375 = vmatprep.mubr.f32.mxu0 %v212
        %376 = vmatmul.mubr.f32.gmra.mrb[0].mxu0 %v211
        %v377 = vpop.f32.mrb[0].mxu0
        %v378 = vadd.f32 %v292, %v377
        %v379 = vpop.f32.mrb[0].mxu0
        %v380 = vadd.f32 %v296, %v379
        %381 = vmatprep.mubr.f32.mxu0 %v214
        %382 = vmatmul.mubr.f32.gmra.mrb[0].mxu0 %v213
        %v383 = vpop.f32.mrb[0].mxu0
        %v384 = vadd.f32 %v292, %v383
        %v385 = vpop.f32.mrb[0].mxu0
        %v386 = vadd.f32 %v296, %v385
        %387 = vmatprep.mubr.f32.mxu0 %v216
        %388 = vmatmul.mubr.f32.gmra.mrb[0].mxu0 %v215
        %v389 = vpop.f32.mrb[0].mxu0
        %v390 = vadd.f32 %v292, %v389
        %v391 = vpop.f32.mrb[0].mxu0
        %v392 = vadd.f32 %v296, %v391
        %393 = vmatprep.mubr.f32.mxu0 %v218
        %394 = vmatmul.mubr.f32.gmra.mrb[0].mxu0 %v217
        %v395 = vpop.f32.mrb[0].mxu0
        %v396 = vadd.f32 %v292, %v395
        %v397 = vpop.f32.mrb[0].mxu0
        %v398 = vadd.f32 %v296, %v397
        %399 = vmatprep.mubr.f32.mxu0 %v220
        %400 = vmatmul.mubr.f32.gmra.mrb[0].mxu0 %v219
        %v401 = vpop.f32.mrb[0].mxu0
        %v402 = vadd.f32 %v292, %v401
        %v403 = vpop.f32.mrb[0].mxu0
        %v404 = vadd.f32 %v296, %v403
        %405 = vmatprep.mubr.f32.mxu0 %v222
        %406 = vmatmul.mubr.f32.gmra.mrb[0].mxu0 %v221
        %v407 = vpop.f32.mrb[0].mxu0
        %v408 = vadd.f32 %v292, %v407
        %v409 = vpop.f32.mrb[0].mxu0
        %v410 = vadd.f32 %v296, %v409
        %411 = vdwg.mxu0
        %v412 = vadd.f32 %v366, %v207
        %v413 = vadd.f32 %v368, %v208
        %v414 = vadd.f32 %v372, %v209
        %v415 = vadd.f32 %v374, %v210
        %v416 = vadd.f32 %v378, %v211
        %v417 = vadd.f32 %v380, %v212
        %v418 = vadd.f32 %v384, %v213
        %v419 = vadd.f32 %v386, %v214
        %v420 = vadd.f32 %v390, %v215
        %v421 = vadd.f32 %v392, %v216
        %v422 = vadd.f32 %v396, %v217
        %v423 = vadd.f32 %v398, %v218
        %v424 = vadd.f32 %v402, %v219
        %v425 = vadd.f32 %v404, %v220
        %v426 = vadd.f32 %v408, %v221
        %v427 = vadd.f32 %v410, %v222
        %428 = vst [vmem:[%s204] sm:$0xff] %v412
        %429 = vst [vmem:[%s204 + $0x8] sm:$0xff] %v413
        %430 = vst [vmem:[%s204 + $0x10] sm:$0xff] %v414
        %431 = vst [vmem:[%s204 + $0x18] sm:$0xff] %v415
        %432 = vst [vmem:[%s204 + $0x20] sm:$0xff] %v416
        %433 = vst [vmem:[%s204 + $0x28] sm:$0xff] %v417
        %434 = vst [vmem:[%s204 + $0x30] sm:$0xff] %v418
        %435 = vst [vmem:[%s204 + $0x38] sm:$0xff] %v419
        %436 = vst [vmem:[%s204 + $0x40] sm:$0xff] %v420
        %437 = vst [vmem:[%s204 + $0x48] sm:$0xff] %v421
        %438 = vst [vmem:[%s204 + $0x50] sm:$0xff] %v422
        %439 = vst [vmem:[%s204 + $0x58] sm:$0xff] %v423
        %440 = vst [vmem:[%s204 + $0x60] sm:$0xff] %v424
        %441 = vst [vmem:[%s204 + $0x68] sm:$0xff] %v425
        %442 = vst [vmem:[%s204 + $0x70] sm:$0xff] %v426
        %443 = vst [vmem:[%s204 + $0x78] sm:$0xff] %v427
        %s444 = sand.u32 %s97, 1
        %s445 = scalar_lea.sflag [#allocation4], %s444
        %s446 = sand.u32 %s97, 1
        %s447 = smul.addr %s446, 128
        %s448 = scalar_lea.vmem [#allocation7], %s447
        // Predicated region
        $region41: #{tpu_custom_call.1} parent=31 // pred_check
          %p449 = pneg %p107
        $region42: #{tpu_custom_call.1} parent=31 // pred_check_branch
          %451 = sbr.rel (%p449) target = $region44
        $region43: #{tpu_custom_call.1} parent=31 // pred_region
          %s452 = smul.u32 8, %s21
          %s454 = ssub.s32 2048, 2048
          %455 = vsyncadd %s445, %s454
          %s456 = smul.addr %s452, 2
          %s457 = smul.addr %s456, 128
          %s458 = scalar_lea.hbm %s3, %s457
          %s459 = sshll.u32 %s448, 4
          %s460 = int_to_ptr.vmem [resolvable:$true] %s459
          %465 = dma.vmem_to_hbm [thread:$0]  %s460, 2048, %s458, %s445, 256, 256, 16
        $region44: #{tpu_custom_call.1} parent=31 // pred_fallthru
          _
      $region32: #{tpu_custom_call.1} parent=5 // pred_fallthru
        _
      %p466 = scmp.le.s32.totalorder 2, %s16
      // Predicated region
      $region45: #{tpu_custom_call.1} parent=5 // pred_check
        %p467 = pneg %p466
      $region46: #{tpu_custom_call.1} parent=5 // pred_check_branch
        %469 = sbr.rel (%p467) target = $region48
      $region47: #{tpu_custom_call.1} parent=5 // pred_region
        %s470 = ssub.s32 %s16, 2
        // Predicated region
        $region49: #{tpu_custom_call.1} parent=47 // pred_check
          %p471 = pneg %p113
        $region50: #{tpu_custom_call.1} parent=47 // pred_check_branch
          %473 = sbr.rel (%p471) target = $region52
        $region51: #{tpu_custom_call.1} parent=47 // pred_region
          %s474 = sand.u32 %s98, 1
          %s475 = scalar_lea.sflag [#allocation4], %s474
          %s476 = sand.u32 %s98, 1
          %s477 = smul.addr %s476, 128
          %s478 = scalar_lea.vmem [#allocation7], %s477
          %479 = dma.done %s475, 2048
        $region52: #{tpu_custom_call.1} parent=47 // pred_fallthru
          _
      $region48: #{tpu_custom_call.1} parent=5 // pred_fallthru
        _
    $region6: #{tpu_custom_call.1} parent=1 // loop_footer
      %s20 = sadd.s32 1, %s16
    $region7: #{tpu_custom_call.1} parent=1 // loop_footer_branch
      %15 = sbr.rel target = $region3
    $region8: #{tpu_custom_call.1} parent=1 // loop_exit
      _
    %480 = vsyncpa [#allocation3], 1
    %s481 = scalar_lea.sflag [#allocation3], 1
    %482 = vsyncpa %s481, 1
    %483 = vsyncpa [#allocation6], 1
    %484 = vsyncpa [#allocation4], 1
    %s485 = scalar_lea.sflag [#allocation4], 1
    %486 = vsyncpa %s485, 1

</llo_original>
